<compile_context>
chip_gen: v5e
topology: v5e:2x2
jax: 0.10.0
libtpu: 0.0.40
codegen_flags: <defaults>
</compile_context>

<pallas_src>
import jax
import jax.numpy as jnp
from jax import lax
from jax.experimental import pallas as pl
from jax.experimental.pallas import tpu as pltpu


def _cdiv(a, b):
    return -(-a // b)


def _round_up(x, m):
    return (x + m - 1) // m * m


def _one_hot_rule_kernel(x_ref, w_ref, o_ref):
    # x_ref: (tm, K)   batch tile of inputs (K is the full, unblocked extent)
    # w_ref: (1, K)    fully folded weights  w_eff = v_out @ sum_n(w_hidden)
    # o_ref: (1, tm)   lane-dense output row for this batch tile
    # out^T = w_eff @ x_tile^T : one MXU GEMV with f32 accumulation.
    out = lax.dot_general(
        w_ref[...], x_ref[...],
        dimension_numbers=(((1,), (1,)), ((), ())),
        preferred_element_type=jnp.float32,
    )
    # final_activation = sigmoid (EUP slot), stored lane-dense.
    o_ref[...] = jax.nn.sigmoid(out)


def fold_one_hot_rule_weights(w_hidden, v_out, *, compute_dtype=jnp.bfloat16):
    """Fold neuron-sum and output layer into one (1, K) weight row.

    Call ONCE per weight update (not per forward call):
      w_bar[r, k] = sum_n w_hidden[r, n, k]
      w_eff[0, k] = sum_r v_out[0, r] * w_bar[r, k]
    Exact in real arithmetic (sigmoid applied after both linears).
    """
    w_bar = jnp.sum(w_hidden.astype(jnp.float32), axis=1)   # (R, K)
    w_eff = jnp.dot(v_out.astype(jnp.float32), w_bar)       # (1, K)
    return w_eff.astype(compute_dtype)


def _derive_batch_tile(B, K, itemsize, *, vmem_budget=48 * 1024 * 1024,
                       max_tile=4096, min_grid_steps=4):
    """Largest lane-aligned batch tile fitting the VMEM budget while keeping
    the grid >= min_grid_steps (so v7x's two TensorCores both get work)."""
    k_vmem = _round_up(K, 128)                    # lanes are padded in VMEM
    weight_bytes = 2 * 8 * k_vmem * itemsize      # (1, K) block, double-buffered
    per_row = 2 * k_vmem * itemsize + 2 * 4       # dbl-buffered x row + f32 out
    cap_vmem = max((vmem_budget - weight_bytes) // per_row, 128)
    cap_vmem = cap_vmem // 128 * 128
    cap_grid = _round_up(_cdiv(B, min_grid_steps), 128)
    return max(128, min(max_tile, cap_vmem, cap_grid))


def one_hot_rule_nn(x, w_eff, *, block_batch=None, interpret=False):
    """x: (B, K) float array, w_eff: (1, K) folded weights -> (B, 1) float32."""
    B, K = x.shape
    assert w_eff.shape == (1, K), w_eff.shape

    compute_dtype = w_eff.dtype
    # Only cast if needed; ideally the caller already supplies x in the compute
    # dtype so the kernel streams it straight from HBM with no extra copy.
    x_c = x if x.dtype == compute_dtype else x.astype(compute_dtype)

    itemsize = jnp.dtype(compute_dtype).itemsize
    if block_batch is None:
        tm = _derive_batch_tile(B, K, itemsize)
    else:
        tm = max(128, _round_up(block_batch, 128))
    n_blocks = _cdiv(B, tm)

    cost = pl.CostEstimate(
        flops=2 * B * K,
        transcendentals=B,
        bytes_accessed=B * K * itemsize + K * itemsize + n_blocks * tm * 4,
    )

    out = pl.pallas_call(
        _one_hot_rule_kernel,
        out_shape=jax.ShapeDtypeStruct((1, n_blocks * tm), jnp.float32),
        grid=(n_blocks,),
        in_specs=[
            # Batch-tiled x; K is full-extent (unblocked) so no HBM-side copy
            # or padding of x is ever materialized.  The ragged batch tail only
            # pollutes output lanes the wrapper slice discards (never K).
            pl.BlockSpec((tm, K), lambda i: (i, 0)),
            # Tiny folded weight, resident across the whole grid.
            pl.BlockSpec((1, K), lambda i: (0, 0)),
        ],
        out_specs=pl.BlockSpec((1, tm), lambda i: (0, i)),   # lane-dense out
        compiler_params=pltpu.CompilerParams(
            dimension_semantics=("parallel",),
            # Tile derivation budgets <= 48 MiB -> safe on v7x (64 MiB VMEM)
            # while leaving v5e/v6e (128 MiB) plenty of headroom.
            vmem_limit_bytes=48 * 1024 * 1024,
        ),
        cost_estimate=cost,
        interpret=interpret,
    )(x_c, w_eff)

    # Drop batch-tail padding and return the module's (B, 1) column shape.
    return out[0, :B].reshape(B, 1)


def _reference(x, w_hidden, v_out):
    # Pure-JAX reference mirroring the PyTorch forward literally (float32).
    cols = []
    for r in range(w_hidden.shape[0]):
        h = x @ w_hidden[r].T                      # (B, N)
        cols.append(h.sum(axis=1, keepdims=True))  # (B, 1)
    rule_outputs = jnp.concatenate(cols, axis=1)   # (B, R)
    out = rule_outputs @ v_out.T                   # (B, 1)
    return jax.nn.sigmoid(out)


if __name__ == "__main__":
    # Small shapes consistent with the module's dense forward pass.
    batch = 8
    input_size = 32
    num_neurons = 16
    num_rules = 4

    key = jax.random.PRNGKey(0)
    kx, kw, kv = jax.random.split(key, 3)

    x = jax.random.normal(kx, (batch, input_size), dtype=jnp.float32)

    # nn.Linear-style init: U(-1/sqrt(fan_in), 1/sqrt(fan_in)).
    hidden_bound = 1.0 / jnp.sqrt(jnp.float32(input_size))
    # force_positive_hidden_init defaults to False -> keep signed weights.
    w_hidden = jax.random.uniform(
        kw, (num_rules, num_neurons, input_size),
        minval=-hidden_bound, maxval=hidden_bound, dtype=jnp.float32)

    out_bound = 1.0 / jnp.sqrt(jnp.float32(num_rules))
    # force_positive_out_init defaults to True -> abs() of the init.
    v_out = jnp.abs(jax.random.uniform(
        kv, (1, num_rules),
        minval=-out_bound, maxval=out_bound, dtype=jnp.float32))

    ref = _reference(x, w_hidden, v_out)

    # f32 path: tight parity with the literal forward (up to reassociation).
    w_eff_f32 = fold_one_hot_rule_weights(w_hidden, v_out,
                                          compute_dtype=jnp.float32)
    out_f32 = jax.block_until_ready(one_hot_rule_nn(x, w_eff_f32))
    assert out_f32.shape == (batch, 1), out_f32.shape
    assert jnp.allclose(out_f32, ref, atol=1e-5, rtol=1e-5), (out_f32, ref)

    # bf16 default path (HBM-traffic optimal on all generations): looser tol.
    w_eff_bf16 = fold_one_hot_rule_weights(w_hidden, v_out)   # bf16 default
    out_bf16 = jax.block_until_ready(
        one_hot_rule_nn(x.astype(jnp.bfloat16), w_eff_bf16))
    assert out_bf16.shape == (batch, 1), out_bf16.shape
    assert jnp.allclose(out_bf16, ref, atol=2e-2, rtol=2e-2), (out_bf16, ref)

    print("KERNEL_OK")
</pallas_src>

<mosaic_0001>
module attributes {stable_mosaic.version = 11 : i64} {
  func.func @_one_hot_rule_kernel(%arg0: i32, %arg1: memref<128x32xf32, #tpu.memory_space<vmem>>, %arg2: memref<1x32xf32, #tpu.memory_space<vmem>>, %arg3: memref<1x128xf32, #tpu.memory_space<vmem>>) attributes {dimension_semantics = [#tpu.dimension_semantics<parallel>], iteration_bounds = array<i64: 1>, scalar_prefetch = 0 : i64, scratch_operands = 0 : i64, tpu.core_type = #tpu.core_type<tc>, window_params = [{transform_indices = @transform_0, window_bounds = array<i64: 128, 32>}, {pipeline_mode = #tpu.pipeline_mode<synchronous>, transform_indices = @transform_1, window_bounds = array<i64: 1, 32>}, {transform_indices = @transform_2, window_bounds = array<i64: 1, 128>}]} {
    %c0 = arith.constant 0 : index
    %c0_0 = arith.constant 0 : index
    %0 = vector.load %arg2[%c0, %c0_0] : memref<1x32xf32, #tpu.memory_space<vmem>>, vector<1x32xf32>
    %c0_1 = arith.constant 0 : index
    %c0_2 = arith.constant 0 : index
    %1 = vector.load %arg1[%c0_1, %c0_2] : memref<128x32xf32, #tpu.memory_space<vmem>>, vector<128x32xf32>
    %cst = arith.constant dense<0.000000e+00> : vector<1x128xf32>
    %2 = tpu.matmul %0, %1, %cst {dimension_numbers = #tpu.dot_dimension_numbers<[1], [1], [0], [0], [0, 0, 1, 0], [], []>} : vector<1x32xf32>, vector<128x32xf32>, vector<1x128xf32> -> vector<1x128xf32>
    %3 = arith.negf %2 : vector<1x128xf32>
    %4 = math.exp %3 : vector<1x128xf32>
    %cst_3 = arith.constant 1.000000e+00 : f32
    %5 = vector.broadcast %cst_3 : f32 to vector<1x128xf32>
    %6 = arith.addf %5, %4 : vector<1x128xf32>
    %7 = arith.divf %5, %6 : vector<1x128xf32>
    %c0_4 = arith.constant 0 : index
    %c0_5 = arith.constant 0 : index
    %8 = vector.load %arg3[%c0_4, %c0_5] : memref<1x128xf32, #tpu.memory_space<vmem>>, vector<1x128xf32>
    tpu.vector_store %arg3[%c0_4, %c0_5], %7 {strides = array<i32>} : memref<1x128xf32, #tpu.memory_space<vmem>>, vector<1x128xf32>,
    return
  }
  func.func @transform_0(%arg0: i32) -> (i32, i32) {
    %c0_i32 = arith.constant 0 : i32
    %c0_i32_0 = arith.constant 0 : i32
    return %arg0, %c0_i32 : i32, i32
  }
  func.func @transform_1(%arg0: i32) -> (i32, i32) {
    %c0_i32 = arith.constant 0 : i32
    %c0_i32_0 = arith.constant 0 : i32
    %c0_i32_1 = arith.constant 0 : i32
    return %c0_i32, %c0_i32_0 : i32, i32
  }
  func.func @transform_2(%arg0: i32) -> (i32, i32) {
    %c0_i32 = arith.constant 0 : i32
    %c0_i32_0 = arith.constant 0 : i32
    return %c0_i32, %arg0 : i32, i32
  }
}

</mosaic_0001>

<llo_original>
// kernel: tpu_custom_call.1
$region0: #{tpu_custom_call.1}
  #allocation0 [shape = 'u32[]', space=smem, size = 0x4, offset = 0x4, fixed_abs, tag = 'smem constant byte address 0x4 - core index']
  #allocation1 [shape = 'u32[72,128]{1,0:T(1,128)}', space=vmem, size = 0x9000, scoped, tag = 'internal scratch']
  %s0 = inlined_call_operand.hbm [shape: f32[8,32], index: 0, kind: input, shape index: {}]
  %s1 = inlined_call_operand.hbm [shape: f32[1,32], index: 1, kind: input, shape index: {}]
  %s2 = inlined_call_operand.hbm [shape: f32[1,128], index: 2, kind: output, shape index: {}]
  %s3 = sld [smem:[#allocation0]]
  $region26: #{tpu_custom_call.1} parent=0
    _
  %s5 = ssub.s32 1, %s3
  %s6 = scalar_select 0, %s5, %s3
  $region1: #{tpu_custom_call.1} parent=0
    #allocation2 [shape = 'u8[65536]{0}', space=vmem, size = 0x10000, scoped, tag = 'input window, operand 0, single buffered']
    #allocation3 [shape = 's32[1]{0}', space=sflag, size = 0x4, scoped, tag = 'scoped memory for tpu_custom_call.1']
    #allocation4 [shape = 's32[1]{0}', space=sflag, size = 0x4, scoped, tag = 'scoped memory for tpu_custom_call.1']
    #allocation5 [shape = 'u8[512]{0}', space=vmem, size = 0x400, scoped, tag = 'input window, operand 1, single buffered']
    #allocation6 [shape = 's32[1]{0}', space=sflag, size = 0x4, scoped, tag = 'scoped memory for tpu_custom_call.1']
    #allocation7 [shape = 'u8[512]{0}', space=vmem, size = 0x400, scoped, tag = 'output window, operand 0, single buffered']
    %7 = vsyncpa [#allocation3], 0
    %8 = vsyncpa [#allocation6], 0
    %9 = vsyncpa [#allocation4], 0
    // Predicated region
    $region2: #{tpu_custom_call.1} parent=1 // pred_check
      _
    $region3: #{tpu_custom_call.1} parent=1 // pred_check_branch
      %11 = sbr.rel (0) target = $region5
    $region4: #{tpu_custom_call.1} parent=1 // pred_region
      %13 = vsyncadd [#allocation3], 1920
      %s14 = sshll.u32 %s0, 4
      %s15 = int_to_ptr.hbm [resolvable:$true] %s14
      %s16 = sshll.u32 [#allocation2], 4
      %s17 = int_to_ptr.vmem [resolvable:$true] %s16
      %22 = dma.hbm_to_vmem [thread:$0]  %s15, 128, %s17, [#allocation3], 128, 128, 8
    $region5: #{tpu_custom_call.1} parent=1 // pred_fallthru
      _
    // Predicated region
    $region6: #{tpu_custom_call.1} parent=1 // pred_check
      _
    $region7: #{tpu_custom_call.1} parent=1 // pred_check_branch
      %24 = sbr.rel (0) target = $region9
    $region8: #{tpu_custom_call.1} parent=1 // pred_region
      %26 = vsyncadd [#allocation6], 0
      %s28 = sshll.u32 %s1, 4
      %s29 = int_to_ptr.hbm [resolvable:$true] %s28
      %s30 = sshll.u32 [#allocation5], 4
      %s31 = int_to_ptr.vmem [resolvable:$true] %s30
      %33 = dma.hbm_to_vmem [thread:$0]  %s29, 16, %s31, [#allocation6]
    $region9: #{tpu_custom_call.1} parent=1 // pred_fallthru
      _
    // Predicated region
    $region10: #{tpu_custom_call.1} parent=1 // pred_check
      _
    $region11: #{tpu_custom_call.1} parent=1 // pred_check_branch
      %35 = sbr.rel (0) target = $region13
    $region12: #{tpu_custom_call.1} parent=1 // pred_region
      %37 = dma.done [#allocation3], 2048
    $region13: #{tpu_custom_call.1} parent=1 // pred_fallthru
      _
    // Predicated region
    $region14: #{tpu_custom_call.1} parent=1 // pred_check
      _
    $region15: #{tpu_custom_call.1} parent=1 // pred_check_branch
      %39 = sbr.rel (0) target = $region17
    $region16: #{tpu_custom_call.1} parent=1 // pred_region
      %41 = dma.done [#allocation6], 16
    $region17: #{tpu_custom_call.1} parent=1 // pred_fallthru
      _
    %v42 = vld [vmem:[#allocation5] sm:$0x1]
    %v43 = vld [vmem:[#allocation2] sm:$0xff]
    %v44 = vld [vmem:[#allocation2 + $0x8] sm:$0xff]
    %v45 = vld [vmem:[#allocation2 + $0x10] sm:$0xff]
    %v46 = vld [vmem:[#allocation2 + $0x18] sm:$0xff]
    %v47 = vld [vmem:[#allocation2 + $0x20] sm:$0xff]
    %v48 = vld [vmem:[#allocation2 + $0x28] sm:$0xff]
    %v49 = vld [vmem:[#allocation2 + $0x30] sm:$0xff]
    %v50 = vld [vmem:[#allocation2 + $0x38] sm:$0xff]
    %v51 = vld [vmem:[#allocation2 + $0x40] sm:$0xff]
    %v52 = vld [vmem:[#allocation2 + $0x48] sm:$0xff]
    %v53 = vld [vmem:[#allocation2 + $0x50] sm:$0xff]
    %v54 = vld [vmem:[#allocation2 + $0x58] sm:$0xff]
    %v55 = vld [vmem:[#allocation2 + $0x60] sm:$0xff]
    %v56 = vld [vmem:[#allocation2 + $0x68] sm:$0xff]
    %v57 = vld [vmem:[#allocation2 + $0x70] sm:$0xff]
    %v58 = vld [vmem:[#allocation2 + $0x78] sm:$0xff]
    %vm59 = vcmask 261120
    %v61 = vsel %vm59, %v42, 0
    %v64 = vsel %vm59, %v43, 0
    %v67 = vsel %vm59, %v44, 0
    %v70 = vsel %vm59, %v45, 0
    %v73 = vsel %vm59, %v46, 0
    %v76 = vsel %vm59, %v47, 0
    %v79 = vsel %vm59, %v48, 0
    %v82 = vsel %vm59, %v49, 0
    %v85 = vsel %vm59, %v50, 0
    %v88 = vsel %vm59, %v51, 0
    %v91 = vsel %vm59, %v52, 0
    %v94 = vsel %vm59, %v53, 0
    %v97 = vsel %vm59, %v54, 0
    %v100 = vsel %vm59, %v55, 0
    %v103 = vsel %vm59, %v56, 0
    %v106 = vsel %vm59, %v57, 0
    %v109 = vsel %vm59, %v58, 0
    %111 = vmatpush.xpose.msra.mxu0 %v109
    %112 = vmatpush.xpose.msra.mxu0 %v106
    %113 = vmatpush.xpose.msra.mxu0 %v103
    %114 = vmatpush.xpose.msra.mxu0 %v100
    %115 = vmatpush.xpose.msra.mxu0 %v97
    %116 = vmatpush.xpose.msra.mxu0 %v94
    %117 = vmatpush.xpose.msra.mxu0 %v91
    %118 = vmatpush.xpose.msra.mxu0 %v88
    %119 = vmatpush.xpose.msra.mxu0 %v85
    %120 = vmatpush.xpose.msra.mxu0 %v82
    %121 = vmatpush.xpose.msra.mxu0 %v79
    %122 = vmatpush.xpose.msra.mxu0 %v76
    %123 = vmatpush.xpose.msra.mxu0 %v73
    %124 = vmatpush.xpose.msra.mxu0 %v70
    %125 = vmatpush.xpose.msra.mxu0 %v67
    %126 = vmatpush.xpose.msra.mxu0 %v64
    %127 = vmatmul.f32.gmra.mxu0 %v61
    %v128 = vpop.f32.mrf.mxu0
    %v129 = vadd.f32 0.0, %v128
    %130 = vdwg.mxu0
    %v131 = vxor.u32 %v129, 2147483648
    %v132 = vmul.f32 %v131, 1.442695
    %v133 = vpow.pop %v132
    %v134 = vadd.f32 %v133, 1.0
    %v135 = vrcp.pop %v134
    %v136 = vmul.f32 %v134, %v135
    %v137 = vsub.f32 1.0, %v136
    %v138 = vmul.f32 %v135, %v137
    %v139 = vadd.f32 %v135, %v138
    %vm140 = vweird.f32 %v134
    %vm141 = vweird.f32 %v135
    %vm142 = vmor %vm140, %vm141
    %v143 = vsel %vm142, %v135, %v139
    %v144 = vand.u32 2147483647, %v134
    %vm145 = vcmp.eq.f32.partialorder %v144, 8.507059e+37
    %v146 = vand.u32 %v134, 2147483648
    %v147 = vor.u32 1.1754944e-38, %v146
    %v148 = vsel %vm145, %v147, %v143
    %v149 = vmul.f32 1.0, %v148
    %150 = vst [vmem:[#allocation7] sm:$0x1] %v149
    // Predicated region
    $region18: #{tpu_custom_call.1} parent=1 // pred_check
      _
    $region19: #{tpu_custom_call.1} parent=1 // pred_check_branch
      %152 = sbr.rel (0) target = $region21
    $region20: #{tpu_custom_call.1} parent=1 // pred_region
      %154 = vsyncadd [#allocation4], 0
      %s156 = sshll.u32 [#allocation7], 4
      %s157 = int_to_ptr.vmem [resolvable:$true] %s156
      %s158 = sshll.u32 %s2, 4
      %s159 = int_to_ptr.hbm [resolvable:$true] %s158
      %161 = dma.vmem_to_hbm [thread:$0]  %s157, 16, %s159, [#allocation4]
    $region21: #{tpu_custom_call.1} parent=1 // pred_fallthru
      _
    // Predicated region
    $region22: #{tpu_custom_call.1} parent=1 // pred_check
      _
    $region23: #{tpu_custom_call.1} parent=1 // pred_check_branch
      %163 = sbr.rel (0) target = $region25
    $region24: #{tpu_custom_call.1} parent=1 // pred_region
      %165 = dma.done [#allocation4], 16
    $region25: #{tpu_custom_call.1} parent=1 // pred_fallthru
      _
    %166 = vsyncpa [#allocation3], 1
    %167 = vsyncpa [#allocation6], 1
    %168 = vsyncpa [#allocation4], 1

</llo_original>
